<compile_context>
chip_gen: v5e
topology: v5e:2x2
jax: 0.10.0
libtpu: 0.0.40
codegen_flags: <defaults>
</compile_context>

<pallas_src>
import jax
import jax.numpy as jnp
from jax.experimental import pallas as pl
from jax.experimental.pallas import tpu as pltpu


def _round_up(n, m):
    return ((n + m - 1) // m) * m


def fused_branches_kernel(x_ref, w_in_ref, b_in_ref, w_out_ref, b_out_ref, o_ref):
    cdt = w_in_ref.dtype                      # compute dtype for the MXU (bf16 or f32)
    x = x_ref[...].astype(cdt)                # cast x tile for the matmul only
    # hidden = relu(X @ [W1_in | W2_in | 0] + [b1_in | b2_in | 0]); accumulate + VPU math in f32
    h = jnp.dot(x, w_in_ref[...], preferred_element_type=jnp.float32)
    h = jnp.maximum(h + b_in_ref[...], 0.0)
    # out = hidden @ blockdiag(W1_out, W2_out) + [b1_out | b2_out | 0]
    o = jnp.dot(h.astype(cdt), w_out_ref[...], preferred_element_type=jnp.float32)
    o_ref[...] = (o + b_out_ref[...]).astype(o_ref.dtype)   # one lane-dense (TM, OUTp) store


def pack_params(params, compute_dtype=jnp.bfloat16):
    """Pre-pack ONCE (outside the hot path): fuse + lane-pad the four weight matrices."""
    D = params["input_dim"]
    w1i, w2i = params["l1_w_in"], params["l2_w_in"]
    w1o, w2o = params["l1_w_out"], params["l2_w_out"]
    H1, H2 = w1i.shape[1], w2i.shape[1]
    O = w1o.shape[1]
    H = H1 + H2
    Hp = _round_up(max(H, 128), 128)       # lane-dense hidden width
    OUTp = _round_up(max(2 * O, 128), 128)  # lane-dense output width

    w_in = jnp.zeros((D, Hp), compute_dtype)
    w_in = w_in.at[:, :H1].set(w1i.astype(compute_dtype))
    w_in = w_in.at[:, H1:H].set(w2i.astype(compute_dtype))

    b_in = jnp.zeros((1, Hp), jnp.float32)
    b_in = b_in.at[0, :H1].set(params["l1_b_in"].astype(jnp.float32))
    b_in = b_in.at[0, H1:H].set(params["l2_b_in"].astype(jnp.float32))

    # Block-diagonal W_out, zero-padded to (Hp, OUTp); padded hidden cols hit zero rows.
    w_out = jnp.zeros((Hp, OUTp), compute_dtype)
    w_out = w_out.at[:H1, :O].set(w1o.astype(compute_dtype))
    w_out = w_out.at[H1:H, O:2 * O].set(w2o.astype(compute_dtype))

    b_out = jnp.zeros((1, OUTp), jnp.float32)
    b_out = b_out.at[0, :O].set(params["l1_b_out"].astype(jnp.float32))
    b_out = b_out.at[0, O:2 * O].set(params["l2_b_out"].astype(jnp.float32))

    return {
        "input_dim": D, "out_dim": 2 * O, "Hp": Hp, "OUTp": OUTp,
        "w_in": w_in, "b_in": b_in, "w_out": w_out, "b_out": b_out,
    }


def _choose_tile_m(B, D, Hp, OUTp, x_itemsize, w_itemsize, out_itemsize):
    """Largest batch tile fitting a conservative scoped-VMEM budget (v5e 16 MiB default).

    Conservative model: every operand double-buffered.
      resident = 2*(D*Hp + Hp*OUTp)*w_bytes + 2*(Hp+OUTp)*4      (weights + biases)
      per_row  = 2*D*x_bytes + 2*OUTp*out_bytes + Hp*4           (x tile, out tile, f32 hidden)
    """
    budget = int(16 * 1024 * 1024 * 0.75)       # 25% headroom for Mosaic internal scratch
    resident = 2 * (D * Hp + Hp * OUTp) * w_itemsize + 2 * (Hp + OUTp) * 4
    per_row = 2 * D * x_itemsize + 2 * OUTp * out_itemsize + Hp * 4
    tm_cap = max(8, ((budget - resident) // per_row) // 8 * 8)
    tm_cap = min(tm_cap, 1024)                  # big tiles amortize ~0.35us/step overhead
    tm = min(_round_up(B, 8), tm_cap)
    # v7x has 2 TensorCores: for moderately large batches force >= 2 parallel grid steps.
    if B >= 256 and pl.cdiv(B, tm) < 2:
        tm = max(_round_up(pl.cdiv(B, 2), 8), 128)
    return tm


def bayes_linear_ln2_forward(x, packed):
    """BayesLinearLn2.forward (eval mode, sample=False): one fused Pallas call."""
    D = packed["input_dim"]
    out_dim = packed["out_dim"]
    Hp, OUTp = packed["Hp"], packed["OUTp"]
    w_in, b_in, w_out, b_out = packed["w_in"], packed["b_in"], packed["w_out"], packed["b_out"]

    x2d = x.reshape(-1, D)
    B = x2d.shape[0]
    out_dtype = x2d.dtype

    x_itemsize = jnp.dtype(x2d.dtype).itemsize
    w_itemsize = jnp.dtype(w_in.dtype).itemsize
    out_itemsize = jnp.dtype(out_dtype).itemsize

    TM = _choose_tile_m(B, D, Hp, OUTp, x_itemsize, w_itemsize, out_itemsize)
    grid = (pl.cdiv(B, TM),)

    # Explicit scoped-VMEM limit sized to the tile plan (weights + x/out tiles + f32 hidden),
    # doubled for headroom, clamped to stay within every generation's physical VMEM.
    vmem_need = (2 * (D * Hp + Hp * OUTp) * w_itemsize + 2 * (Hp + OUTp) * 4
                 + 2 * TM * D * x_itemsize + 2 * TM * OUTp * out_itemsize + TM * Hp * 4)
    vmem_limit = int(min(max(2 * vmem_need, 16 * 1024 * 1024), 48 * 1024 * 1024))

    flops = 2 * B * D * Hp + 2 * B * Hp * OUTp
    bytes_accessed = (B * D * x_itemsize + (D * Hp + Hp * OUTp) * w_itemsize
                      + (Hp + OUTp) * 4 + B * OUTp * out_itemsize)

    out_padded = pl.pallas_call(
        fused_branches_kernel,
        out_shape=jax.ShapeDtypeStruct((B, OUTp), out_dtype),
        grid=grid,
        in_specs=[
            pl.BlockSpec((TM, D), lambda i: (i, 0)),      # x tile (streams over batch)
            pl.BlockSpec((D, Hp), lambda i: (0, 0)),      # packed [W1_in | W2_in | 0] (resident)
            pl.BlockSpec((1, Hp), lambda i: (0, 0)),      # packed f32 hidden biases
            pl.BlockSpec((Hp, OUTp), lambda i: (0, 0)),   # lane-padded block-diag W_out (resident)
            pl.BlockSpec((1, OUTp), lambda i: (0, 0)),    # packed f32 output biases
        ],
        out_specs=pl.BlockSpec((TM, OUTp), lambda i: (i, 0)),
        compiler_params=pltpu.CompilerParams(
            dimension_semantics=("parallel",),
            vmem_limit_bytes=vmem_limit,
        ),
        cost_estimate=pl.CostEstimate(
            flops=flops, transcendentals=0, bytes_accessed=bytes_accessed),
    )(x2d, w_in, b_in, w_out, b_out)

    out = out_padded[:, :out_dim]   # strip lane padding (cheap wrapper-side slice)
    tlqw = 0.0
    tlpw = 0.0
    return out, tlqw, tlpw


def init_params(key, input_dim, output_dim, n_hid, dtype=jnp.float32):
    """Deterministic init mirroring BayesLinear_Normalq: W_mu, b_mu ~ U(-0.01, 0.01)."""
    ks = jax.random.split(key, 8)
    u = lambda k, shape: jax.random.uniform(k, shape, dtype, minval=-0.01, maxval=0.01)
    return {
        "input_dim": input_dim,
        # branch 1: bfc_in (D->H), bfc_out (H->O)
        "l1_w_in": u(ks[0], (input_dim, n_hid)),
        "l1_b_in": u(ks[1], (n_hid,)),
        "l1_w_out": u(ks[2], (n_hid, output_dim)),
        "l1_b_out": u(ks[3], (output_dim,)),
        # branch 2
        "l2_w_in": u(ks[4], (input_dim, n_hid)),
        "l2_b_in": u(ks[5], (n_hid,)),
        "l2_w_out": u(ks[6], (n_hid, output_dim)),
        "l2_b_out": u(ks[7], (output_dim,)),
    }


def reference_forward(x, params):
    """Pure-JAX f32 reference of the same eval-mode forward path."""
    x2d = x.reshape(-1, params["input_dim"])

    def branch(w1, b1, w2, b2):
        h = jnp.maximum(x2d @ w1 + b1[None, :], 0.0)
        return h @ w2 + b2[None, :]

    o1 = branch(params["l1_w_in"], params["l1_b_in"], params["l1_w_out"], params["l1_b_out"])
    o2 = branch(params["l2_w_in"], params["l2_b_in"], params["l2_w_out"], params["l2_b_out"])
    return jnp.concatenate([o1, o2], axis=1)


if __name__ == "__main__":
    key = jax.random.PRNGKey(0)
    k_x, k_p = jax.random.split(key)

    input_dim = 32
    output_dim = 8
    n_hid = 32

    # x of shape (2, 4, 32) -> view(-1, 32) -> (8, 32)
    x = jax.random.normal(k_x, (2, 4, input_dim), dtype=jnp.float32)
    params = init_params(k_p, input_dim, output_dim, n_hid)

    ref = reference_forward(x, params)

    # f32 compute path: tight check of the fused / packed / lane-padded kernel structure.
    packed_f32 = pack_params(params, compute_dtype=jnp.float32)
    out_f32, tlqw, tlpw = bayes_linear_ln2_forward(x, packed_f32)
    out_f32 = jax.block_until_ready(out_f32)
    assert out_f32.shape == (8, 2 * output_dim), out_f32.shape
    assert jnp.allclose(out_f32, ref, atol=1e-5, rtol=1e-5), "f32 kernel mismatch vs reference"
    assert tlqw == 0.0 and tlpw == 0.0

    # bf16 fast path (MXU-native on v6e/v7x, halves weight DMA): looser tolerance.
    packed_bf16 = pack_params(params, compute_dtype=jnp.bfloat16)
    out_bf16, _, _ = bayes_linear_ln2_forward(x, packed_bf16)
    out_bf16 = jax.block_until_ready(out_bf16)
    assert out_bf16.shape == (8, 2 * output_dim), out_bf16.shape
    assert jnp.allclose(out_bf16, ref, atol=1e-4, rtol=5e-2), "bf16 kernel mismatch vs reference"

    print("KERNEL_OK")
</pallas_src>

<mosaic_0001>
module attributes {stable_mosaic.version = 11 : i64} {
  func.func @fused_branches_kernel(%arg0: i32, %arg1: memref<8x32xf32, #tpu.memory_space<vmem>>, %arg2: memref<32x128xf32, #tpu.memory_space<vmem>>, %arg3: memref<1x128xf32, #tpu.memory_space<vmem>>, %arg4: memref<128x128xf32, #tpu.memory_space<vmem>>, %arg5: memref<1x128xf32, #tpu.memory_space<vmem>>, %arg6: memref<8x128xf32, #tpu.memory_space<vmem>>) attributes {dimension_semantics = [#tpu.dimension_semantics<parallel>], iteration_bounds = array<i64: 1>, scalar_prefetch = 0 : i64, scratch_operands = 0 : i64, tpu.core_type = #tpu.core_type<tc>, window_params = [{transform_indices = @transform_0, window_bounds = array<i64: 8, 32>}, {pipeline_mode = #tpu.pipeline_mode<synchronous>, transform_indices = @transform_1, window_bounds = array<i64: 32, 128>}, {pipeline_mode = #tpu.pipeline_mode<synchronous>, transform_indices = @transform_2, window_bounds = array<i64: 1, 128>}, {pipeline_mode = #tpu.pipeline_mode<synchronous>, transform_indices = @transform_3, window_bounds = array<i64: 128, 128>}, {pipeline_mode = #tpu.pipeline_mode<synchronous>, transform_indices = @transform_4, window_bounds = array<i64: 1, 128>}, {transform_indices = @transform_5, window_bounds = array<i64: 8, 128>}]} {
    %c0 = arith.constant 0 : index
    %c0_0 = arith.constant 0 : index
    %0 = vector.load %arg1[%c0, %c0_0] : memref<8x32xf32, #tpu.memory_space<vmem>>, vector<8x32xf32>
    %c0_1 = arith.constant 0 : index
    %c0_2 = arith.constant 0 : index
    %1 = vector.load %arg2[%c0_1, %c0_2] : memref<32x128xf32, #tpu.memory_space<vmem>>, vector<32x128xf32>
    %cst = arith.constant dense<0.000000e+00> : vector<8x128xf32>
    %2 = tpu.matmul %0, %1, %cst {dimension_numbers = #tpu.dot_dimension_numbers<[1], [0], [0], [1], [0, 0, 1, 1], [], []>} : vector<8x32xf32>, vector<32x128xf32>, vector<8x128xf32> -> vector<8x128xf32>
    %c0_3 = arith.constant 0 : index
    %c0_4 = arith.constant 0 : index
    %3 = vector.load %arg3[%c0_3, %c0_4] : memref<1x128xf32, #tpu.memory_space<vmem>>, vector<1x128xf32>
    %4 = vector.broadcast %3 : vector<1x128xf32> to vector<8x128xf32>
    %5 = arith.addf %2, %4 : vector<8x128xf32>
    %cst_5 = arith.constant 0.000000e+00 : f32
    %6 = vector.broadcast %cst_5 : f32 to vector<8x128xf32>
    %7 = arith.maximumf %5, %6 : vector<8x128xf32>
    %c0_6 = arith.constant 0 : index
    %c0_7 = arith.constant 0 : index
    %8 = vector.load %arg4[%c0_6, %c0_7] : memref<128x128xf32, #tpu.memory_space<vmem>>, vector<128x128xf32>
    %cst_8 = arith.constant dense<0.000000e+00> : vector<8x128xf32>
    %9 = tpu.matmul %7, %8, %cst_8 {dimension_numbers = #tpu.dot_dimension_numbers<[1], [0], [0], [1], [0, 0, 1, 1], [], []>} : vector<8x128xf32>, vector<128x128xf32>, vector<8x128xf32> -> vector<8x128xf32>
    %c0_9 = arith.constant 0 : index
    %c0_10 = arith.constant 0 : index
    %10 = vector.load %arg5[%c0_9, %c0_10] : memref<1x128xf32, #tpu.memory_space<vmem>>, vector<1x128xf32>
    %11 = vector.broadcast %10 : vector<1x128xf32> to vector<8x128xf32>
    %12 = arith.addf %9, %11 : vector<8x128xf32>
    %c0_11 = arith.constant 0 : index
    %c0_12 = arith.constant 0 : index
    %13 = vector.load %arg6[%c0_11, %c0_12] : memref<8x128xf32, #tpu.memory_space<vmem>>, vector<8x128xf32>
    tpu.vector_store %arg6[%c0_11, %c0_12], %12 {strides = array<i32>} : memref<8x128xf32, #tpu.memory_space<vmem>>, vector<8x128xf32>,
    return
  }
  func.func @transform_0(%arg0: i32) -> (i32, i32) {
    %c0_i32 = arith.constant 0 : i32
    %c0_i32_0 = arith.constant 0 : i32
    return %arg0, %c0_i32 : i32, i32
  }
  func.func @transform_1(%arg0: i32) -> (i32, i32) {
    %c0_i32 = arith.constant 0 : i32
    %c0_i32_0 = arith.constant 0 : i32
    %c0_i32_1 = arith.constant 0 : i32
    return %c0_i32, %c0_i32_0 : i32, i32
  }
  func.func @transform_2(%arg0: i32) -> (i32, i32) {
    %c0_i32 = arith.constant 0 : i32
    %c0_i32_0 = arith.constant 0 : i32
    %c0_i32_1 = arith.constant 0 : i32
    return %c0_i32, %c0_i32_0 : i32, i32
  }
  func.func @transform_3(%arg0: i32) -> (i32, i32) {
    %c0_i32 = arith.constant 0 : i32
    %c0_i32_0 = arith.constant 0 : i32
    %c0_i32_1 = arith.constant 0 : i32
    return %c0_i32, %c0_i32_0 : i32, i32
  }
  func.func @transform_4(%arg0: i32) -> (i32, i32) {
    %c0_i32 = arith.constant 0 : i32
    %c0_i32_0 = arith.constant 0 : i32
    %c0_i32_1 = arith.constant 0 : i32
    return %c0_i32, %c0_i32_0 : i32, i32
  }
  func.func @transform_5(%arg0: i32) -> (i32, i32) {
    %c0_i32 = arith.constant 0 : i32
    %c0_i32_0 = arith.constant 0 : i32
    return %arg0, %c0_i32 : i32, i32
  }
}

</mosaic_0001>

<llo_original>
// kernel: tpu_custom_call.1
$region0: #{tpu_custom_call.1}
  #allocation0 [shape = 'u32[]', space=smem, size = 0x4, offset = 0x4, fixed_abs, tag = 'smem constant byte address 0x4 - core index']
  #allocation1 [shape = 'u32[72,128]{1,0:T(1,128)}', space=vmem, size = 0x9000, scoped, tag = 'internal scratch']
  %s0 = inlined_call_operand.hbm [shape: f32[8,32], index: 0, kind: input, shape index: {}]
  %s1 = inlined_call_operand.hbm [shape: f32[32,128], index: 1, kind: input, shape index: {}]
  %s2 = inlined_call_operand.vmem [shape: f32[1,128], index: 2, kind: input, shape index: {}]
  %s3 = inlined_call_operand.hbm [shape: f32[128,128], index: 3, kind: input, shape index: {}]
  %s4 = inlined_call_operand.vmem [shape: f32[1,128], index: 4, kind: input, shape index: {}]
  %s5 = inlined_call_operand.hbm [shape: f32[8,128], index: 5, kind: output, shape index: {}]
  %s6 = sld [smem:[#allocation0]]
  $region42: #{tpu_custom_call.1} parent=0
    _
  %s8 = ssub.s32 1, %s6
  %s9 = scalar_select 0, %s8, %s6
  $region1: #{tpu_custom_call.1} parent=0
    #allocation2 [shape = 'u8[4096]{0}', space=vmem, size = 0x1000, scoped, tag = 'input window, operand 0, single buffered']
    #allocation3 [shape = 's32[1]{0}', space=sflag, size = 0x4, scoped, tag = 'scoped memory for tpu_custom_call.1']
    #allocation4 [shape = 's32[1]{0}', space=sflag, size = 0x4, scoped, tag = 'scoped memory for tpu_custom_call.1']
    #allocation5 [shape = 'u8[16384]{0}', space=vmem, size = 0x4000, scoped, tag = 'input window, operand 1, single buffered']
    #allocation6 [shape = 's32[1]{0}', space=sflag, size = 0x4, scoped, tag = 'scoped memory for tpu_custom_call.1']
    #allocation7 [shape = 'u8[65536]{0}', space=vmem, size = 0x10000, scoped, tag = 'input window, operand 3, single buffered']
    #allocation8 [shape = 'u8[4096]{0}', space=vmem, size = 0x1000, scoped, tag = 'output window, operand 0, single buffered']
    %10 = vsyncpa [#allocation3], 0
    %11 = vsyncpa [#allocation6], 0
    %12 = vsyncpa [#allocation4], 0
    // Predicated region
    $region2: #{tpu_custom_call.1} parent=1 // pred_check
      _
    $region3: #{tpu_custom_call.1} parent=1 // pred_check_branch
      %14 = sbr.rel (0) target = $region5
    $region4: #{tpu_custom_call.1} parent=1 // pred_region
      %16 = vsyncadd [#allocation3], 0
      %s18 = sshll.u32 %s0, 4
      %s19 = int_to_ptr.hbm [resolvable:$true] %s18
      %s20 = sshll.u32 [#allocation2], 4
      %s21 = int_to_ptr.vmem [resolvable:$true] %s20
      %23 = dma.hbm_to_vmem [thread:$0]  %s19, 128, %s21, [#allocation3]
    $region5: #{tpu_custom_call.1} parent=1 // pred_fallthru
      _
    // Predicated region
    $region6: #{tpu_custom_call.1} parent=1 // pred_check
      _
    $region7: #{tpu_custom_call.1} parent=1 // pred_check_branch
      %25 = sbr.rel (0) target = $region9
    $region8: #{tpu_custom_call.1} parent=1 // pred_region
      %27 = vsyncadd [#allocation6], 0
      %s28 = sshll.u32 %s1, 4
      %s29 = int_to_ptr.hbm [resolvable:$true] %s28
      %s30 = sshll.u32 [#allocation5], 4
      %s31 = int_to_ptr.vmem [resolvable:$true] %s30
      %36 = dma.hbm_to_vmem [thread:$0]  %s29, 512, %s31, [#allocation6], 128, 128, 8
    $region9: #{tpu_custom_call.1} parent=1 // pred_fallthru
      _
    // Predicated region
    $region10: #{tpu_custom_call.1} parent=1 // pred_check
      _
    $region11: #{tpu_custom_call.1} parent=1 // pred_check_branch
      %38 = sbr.rel (0) target = $region13
    $region12: #{tpu_custom_call.1} parent=1 // pred_region
      _
    $region13: #{tpu_custom_call.1} parent=1 // pred_fallthru
      _
    // Predicated region
    $region14: #{tpu_custom_call.1} parent=1 // pred_check
      _
    $region15: #{tpu_custom_call.1} parent=1 // pred_check_branch
      %40 = sbr.rel (0) target = $region17
    $region16: #{tpu_custom_call.1} parent=1 // pred_region
      %42 = vsyncadd [#allocation6], 0
      %s43 = sshll.u32 %s3, 4
      %s44 = int_to_ptr.hbm [resolvable:$true] %s43
      %s45 = sshll.u32 [#allocation7], 4
      %s46 = int_to_ptr.vmem [resolvable:$true] %s45
      %51 = dma.hbm_to_vmem [thread:$0]  %s44, 2048, %s46, [#allocation6], 128, 128, 8
    $region17: #{tpu_custom_call.1} parent=1 // pred_fallthru
      _
    // Predicated region
    $region18: #{tpu_custom_call.1} parent=1 // pred_check
      _
    $region19: #{tpu_custom_call.1} parent=1 // pred_check_branch
      %53 = sbr.rel (0) target = $region21
    $region20: #{tpu_custom_call.1} parent=1 // pred_region
      _
    $region21: #{tpu_custom_call.1} parent=1 // pred_fallthru
      _
    // Predicated region
    $region22: #{tpu_custom_call.1} parent=1 // pred_check
      _
    $region23: #{tpu_custom_call.1} parent=1 // pred_check_branch
      %55 = sbr.rel (0) target = $region25
    $region24: #{tpu_custom_call.1} parent=1 // pred_region
      %57 = dma.done [#allocation3], 128
    $region25: #{tpu_custom_call.1} parent=1 // pred_fallthru
      _
    // Predicated region
    $region26: #{tpu_custom_call.1} parent=1 // pred_check
      _
    $region27: #{tpu_custom_call.1} parent=1 // pred_check_branch
      %59 = sbr.rel (0) target = $region29
    $region28: #{tpu_custom_call.1} parent=1 // pred_region
      %61 = dma.done [#allocation6], 512
    $region29: #{tpu_custom_call.1} parent=1 // pred_fallthru
      _
    // Predicated region
    $region30: #{tpu_custom_call.1} parent=1 // pred_check
      _
    $region31: #{tpu_custom_call.1} parent=1 // pred_check_branch
      %63 = sbr.rel (0) target = $region33
    $region32: #{tpu_custom_call.1} parent=1 // pred_region
      %65 = dma.done [#allocation6], 2048
    $region33: #{tpu_custom_call.1} parent=1 // pred_fallthru
      _
    %v66 = vld [vmem:[#allocation2] sm:$0xff]
    %v67 = vld [vmem:[#allocation5] sm:$0xff]
    %v68 = vld [vmem:[#allocation5 + $0x8] sm:$0xff]
    %v69 = vld [vmem:[#allocation5 + $0x10] sm:$0xff]
    %v70 = vld [vmem:[#allocation5 + $0x18] sm:$0xff]
    %v71 = vld [vmem:[%s2] sm:$0x1]
    %v73 = vperm.slane %v71, 0
    %vm75 = vcmask 261120
    %v77 = vsel %vm75, %v66, 0
    %79 = vmatpush.msra.mxu0 0.0
    %80 = vmatpush.msra.mxu0 0.0
    %81 = vmatpush.msra.mxu0 0.0
    %82 = vmatpush.msra.mxu0 0.0
    %83 = vmatpush.msra.mxu0 0.0
    %84 = vmatpush.msra.mxu0 0.0
    %85 = vmatpush.msra.mxu0 0.0
    %86 = vmatpush.msra.mxu0 0.0
    %87 = vmatpush.msra.mxu0 0.0
    %88 = vmatpush.msra.mxu0 0.0
    %89 = vmatpush.msra.mxu0 0.0
    %90 = vmatpush.msra.mxu0 0.0
    %91 = vmatpush.msra.mxu0 %v70
    %92 = vmatpush.msra.mxu0 %v69
    %93 = vmatpush.msra.mxu0 %v68
    %94 = vmatpush.msra.mxu0 %v67
    %95 = vmatmul.f32.gmra.mxu0 %v77
    %v96 = vpop.f32.mrf.mxu0
    %v97 = vadd.f32 %v73, %v96
    %98 = vdwg.mxu0
    %v99 = vmax.f32 %v97, 0.0
    %v100 = vld [vmem:[#allocation7] sm:$0xff]
    %v101 = vld [vmem:[#allocation7 + $0x8] sm:$0xff]
    %v102 = vld [vmem:[#allocation7 + $0x10] sm:$0xff]
    %v103 = vld [vmem:[#allocation7 + $0x18] sm:$0xff]
    %v104 = vld [vmem:[#allocation7 + $0x20] sm:$0xff]
    %v105 = vld [vmem:[#allocation7 + $0x28] sm:$0xff]
    %v106 = vld [vmem:[#allocation7 + $0x30] sm:$0xff]
    %v107 = vld [vmem:[#allocation7 + $0x38] sm:$0xff]
    %v108 = vld [vmem:[#allocation7 + $0x40] sm:$0xff]
    %v109 = vld [vmem:[#allocation7 + $0x48] sm:$0xff]
    %v110 = vld [vmem:[#allocation7 + $0x50] sm:$0xff]
    %v111 = vld [vmem:[#allocation7 + $0x58] sm:$0xff]
    %v112 = vld [vmem:[#allocation7 + $0x60] sm:$0xff]
    %v113 = vld [vmem:[#allocation7 + $0x68] sm:$0xff]
    %v114 = vld [vmem:[#allocation7 + $0x70] sm:$0xff]
    %v115 = vld [vmem:[#allocation7 + $0x78] sm:$0xff]
    %v116 = vld [vmem:[%s4] sm:$0x1]
    %v118 = vperm.slane %v116, 0
    %120 = vmatpush.msra.mxu0 %v115
    %121 = vmatpush.msra.mxu0 %v114
    %122 = vmatpush.msra.mxu0 %v113
    %123 = vmatpush.msra.mxu0 %v112
    %124 = vmatpush.msra.mxu0 %v111
    %125 = vmatpush.msra.mxu0 %v110
    %126 = vmatpush.msra.mxu0 %v109
    %127 = vmatpush.msra.mxu0 %v108
    %128 = vmatpush.msra.mxu0 %v107
    %129 = vmatpush.msra.mxu0 %v106
    %130 = vmatpush.msra.mxu0 %v105
    %131 = vmatpush.msra.mxu0 %v104
    %132 = vmatpush.msra.mxu0 %v103
    %133 = vmatpush.msra.mxu0 %v102
    %134 = vmatpush.msra.mxu0 %v101
    %135 = vmatpush.msra.mxu0 %v100
    %136 = vmatmul.f32.gmra.mxu0 %v99
    %v137 = vpop.f32.mrf.mxu0
    %v138 = vadd.f32 %v118, %v137
    %139 = vdwg.mxu0
    %140 = vst [vmem:[#allocation8] sm:$0xff] %v138
    // Predicated region
    $region34: #{tpu_custom_call.1} parent=1 // pred_check
      _
    $region35: #{tpu_custom_call.1} parent=1 // pred_check_branch
      %142 = sbr.rel (0) target = $region37
    $region36: #{tpu_custom_call.1} parent=1 // pred_region
      %144 = vsyncadd [#allocation4], 0
      %s146 = sshll.u32 [#allocation8], 4
      %s147 = int_to_ptr.vmem [resolvable:$true] %s146
      %s148 = sshll.u32 %s5, 4
      %s149 = int_to_ptr.hbm [resolvable:$true] %s148
      %151 = dma.vmem_to_hbm [thread:$0]  %s147, 128, %s149, [#allocation4]
    $region37: #{tpu_custom_call.1} parent=1 // pred_fallthru
      _
    // Predicated region
    $region38: #{tpu_custom_call.1} parent=1 // pred_check
      _
    $region39: #{tpu_custom_call.1} parent=1 // pred_check_branch
      %153 = sbr.rel (0) target = $region41
    $region40: #{tpu_custom_call.1} parent=1 // pred_region
      %155 = dma.done [#allocation4], 128
    $region41: #{tpu_custom_call.1} parent=1 // pred_fallthru
      _
    %156 = vsyncpa [#allocation3], 1
    %157 = vsyncpa [#allocation6], 1
    %158 = vsyncpa [#allocation4], 1

</llo_original>
